<compile_context>
chip_gen: v7x
topology: tpu7x:2x2x1
jax: 0.10.0
libtpu: 0.0.40
codegen_flags: <defaults>
</compile_context>

<pallas_src>
import math

import jax
import jax.numpy as jnp
from jax.experimental import pallas as pl
from jax.experimental.pallas import tpu as pltpu


_VMEM_LIMIT = 48 * 1024 * 1024   # safe on v5e/v6e (128 MiB) and v7x (64 MiB)


def _round_up(x, m):
    return ((x + m - 1) // m) * m


def _tpu_generation():
    try:
        kind = jax.devices()[0].device_kind.lower()
    except Exception:
        return 6
    for g in (7, 6, 5, 4):
        if "v%d" % g in kind:
            return g
    return 6


def _pick_lane_tile(total, preferred):
    """Largest tile dividing `total` that is <= preferred and a 128-multiple
    (or the full extent when total <= preferred)."""
    if total <= preferred:
        return total
    t = (preferred // 128) * 128
    while t >= 128:
        if total % t == 0:
            return t
        t -= 128
    return total


def _pick_sublane_chunk(total, preferred):
    if total <= preferred:
        return total
    t = (preferred // 8) * 8
    while t >= 8:
        if total % t == 0:
            return t
        t -= 8
    return total


# ------------------------ generic matmul (patch embed) ----------------------

def _matmul_bias_kernel(a_ref, b_ref, bias_ref, o_ref):
    acc = jnp.dot(a_ref[...], b_ref[...], preferred_element_type=jnp.float32)
    o_ref[...] = (acc + bias_ref[...]).astype(o_ref.dtype)


def pallas_matmul(a, b, bias=None, out_dtype=jnp.float32, tm=None):
    """(M, K) @ (K, N) + bias.  bf16 MXU operands, f32 accumulation.

    A is NOT padded/copied: the K block is the full dim and a ragged last M
    tile is handled by Pallas boundary masking.  Only the (small) weight is
    padded on N to a 128-multiple so the output store is lane-dense.
    """
    M, K = a.shape
    K2, N = b.shape
    assert K == K2
    if tm is None:
        tm = 128 if _tpu_generation() == 5 else 256
    tm = tm if M > tm else M                      # full-extent block when small
    Np = _round_up(N, 128)
    a_bf = a.astype(jnp.bfloat16)
    b_p = b.astype(jnp.bfloat16)
    if Np != N:
        b_p = jnp.pad(b_p, ((0, 0), (0, Np - N)))
    if bias is None:
        bias_p = jnp.zeros((1, Np), jnp.float32)
    else:
        bias_p = jnp.pad(bias.astype(jnp.float32).reshape(1, N),
                         ((0, 0), (0, Np - N)))
    out = pl.pallas_call(
        _matmul_bias_kernel,
        out_shape=jax.ShapeDtypeStruct((M, Np), out_dtype),
        grid=(pl.cdiv(M, tm),),
        in_specs=[pl.BlockSpec((tm, K), lambda i: (i, 0)),
                  pl.BlockSpec((K, Np), lambda i: (0, 0)),
                  pl.BlockSpec((1, Np), lambda i: (0, 0))],
        out_specs=pl.BlockSpec((tm, Np), lambda i: (i, 0)),
        compiler_params=pltpu.CompilerParams(
            dimension_semantics=("parallel",),
            vmem_limit_bytes=_VMEM_LIMIT),
    )(a_bf, b_p, bias_p)
    return out[:, :N] if Np != N else out


# ------------- fused Weighted_GAP + semantic / normal cosine priors ---------

def _make_prior_kernel(ls_chunk, n_chunks, eps=1e-7):
    def kernel(qt_ref, s_ref, m_ref, sem_ref, nrm_ref, proto_ref, sn_sc):
        qi = pl.program_id(2)
        C = s_ref.shape[2]

        # once per (layer, batch): support norms (cached in scratch for all
        # query tiles) + Weighted_GAP prototype — single pass over the support
        # block that is already resident for the priors.
        @pl.when(qi == 0)
        def _():
            def init_chunk(off, acc):
                num_acc, area_acc = acc
                s_c = s_ref[0, pl.ds(off, ls_chunk), :].astype(jnp.float32)
                m_c = m_ref[0, pl.ds(off, ls_chunk), :]
                sn_sc[pl.ds(off, ls_chunk), :] = jnp.sqrt(
                    jnp.sum(s_c * s_c, axis=1, keepdims=True))
                num_acc = num_acc + jnp.sum(s_c * m_c, axis=0, keepdims=True)
                area_acc = area_acc + jnp.sum(m_c, keepdims=True).reshape(1, 1)
                return num_acc, area_acc

            zero = (jnp.zeros((1, C), jnp.float32),
                    jnp.zeros((1, 1), jnp.float32))
            if n_chunks == 1:
                num, area = init_chunk(0, zero)
            else:
                num, area = jax.lax.fori_loop(
                    0, n_chunks,
                    lambda ci, acc: init_chunk(
                        pl.multiple_of(ci * ls_chunk, ls_chunk), acc),
                    zero)
            proto_ref[...] = (num / (area + 0.0005))[None, None]

        # per query tile: fused semantic + normal max-cosine priors.
        qt = qt_ref[0]                                    # (C, lq) bf16
        qf = qt.astype(jnp.float32)
        ones_row = jnp.ones((1, C), jnp.float32)
        qn = jnp.sqrt(jax.lax.dot_general(                # (1, lq) ||q||, MXU
            ones_row, qf * qf, (((1,), (0,)), ((), ())),
            preferred_element_type=jnp.float32))

        def chunk(off, carry):
            sem_row, nrm_row = carry
            s_c = s_ref[0, pl.ds(off, ls_chunk), :]       # (ch, C) bf16
            m_c = m_ref[0, pl.ds(off, ls_chunk), :]       # (ch, 1) f32
            sn_c = sn_sc[pl.ds(off, ls_chunk), :]         # (ch, 1) f32
            dot = jax.lax.dot_general(                    # (ch, lq), MXU
                s_c, qt, (((1,), (0,)), ((), ())),
                preferred_element_type=jnp.float32)
            d = sn_c * qn                                 # rank-1 denom (VPU)
            mn = 1.0 - m_c
            sem = (m_c * dot) / (m_c * d + eps)           # exact divides
            nrm = (mn * dot) / (mn * d + eps)
            sem_row = jnp.maximum(sem_row, jnp.max(sem, axis=0, keepdims=True))
            nrm_row = jnp.maximum(nrm_row, jnp.max(nrm, axis=0, keepdims=True))
            return sem_row, nrm_row

        neg = jnp.full((1, qt.shape[1]), -jnp.inf, jnp.float32)
        if n_chunks == 1:
            sem_row, nrm_row = chunk(0, (neg, neg))
        else:
            sem_row, nrm_row = jax.lax.fori_loop(
                0, n_chunks,
                lambda ci, c: chunk(pl.multiple_of(ci * ls_chunk, ls_chunk), c),
                (neg, neg))
        sem_ref[...] = sem_row[None, None]
        nrm_ref[...] = nrm_row[None, None]

    return kernel


def fused_priors(q_tok, s_tok, mask_tok, n_layers, c_feat):
    """Weighted_GAP prototypes + semantic/normal priors for ALL layers.

    q_tok, s_tok: (B, L, nL*C) bf16 token-major features (fused over layers).
    mask_tok:     (B, L, 1) f32 bilinear-resized support mask (shot == 1).
    Returns sem_raw, nrm_raw: (nL, B, 1, L); protos: (nL, B, 1, C).
    """
    B, L, CT = q_tok.shape
    assert CT == n_layers * c_feat and c_feat % 128 == 0
    gen = _tpu_generation()
    lq_pref = 256 if gen >= 7 else 512
    Lp = L
    if L > lq_pref and L % 128 != 0:
        Lp = _round_up(L, 128)               # pad ragged query axis (cols sliced off)
    lq_tile = _pick_lane_tile(Lp, lq_pref)
    ls_chunk = _pick_sublane_chunk(L, 512)
    n_chunks = L // ls_chunk

    # channel-major query layout: in-kernel contraction is (Ls, C) @ (C, Lq),
    # no per-tile transpose competing with the max reductions on the XLU.
    q_t = jnp.swapaxes(q_tok, 1, 2)                       # (B, nL*C, L)
    if Lp != L:
        q_t = jnp.pad(q_t, ((0, 0), (0, 0), (0, Lp - L)))

    kernel = _make_prior_kernel(ls_chunk, n_chunks)
    sem, nrm, proto = pl.pallas_call(
        kernel,
        out_shape=(jax.ShapeDtypeStruct((n_layers, B, 1, Lp), jnp.float32),
                   jax.ShapeDtypeStruct((n_layers, B, 1, Lp), jnp.float32),
                   jax.ShapeDtypeStruct((n_layers, B, 1, c_feat), jnp.float32)),
        grid=(n_layers, B, Lp // lq_tile),
        in_specs=[pl.BlockSpec((1, c_feat, lq_tile), lambda l, b, qi: (b, l, qi)),
                  pl.BlockSpec((1, L, c_feat), lambda l, b, qi: (b, 0, l)),
                  pl.BlockSpec((1, L, 1), lambda l, b, qi: (b, 0, 0))],
        out_specs=(pl.BlockSpec((1, 1, 1, lq_tile), lambda l, b, qi: (l, b, 0, qi)),
                   pl.BlockSpec((1, 1, 1, lq_tile), lambda l, b, qi: (l, b, 0, qi)),
                   pl.BlockSpec((1, 1, 1, c_feat), lambda l, b, qi: (l, b, 0, 0))),
        scratch_shapes=[pltpu.VMEM((L, 1), jnp.float32)],
        compiler_params=pltpu.CompilerParams(
            dimension_semantics=("parallel", "parallel", "arbitrary"),
            vmem_limit_bytes=_VMEM_LIMIT),
    )(q_t, s_tok, mask_tok)
    if Lp != L:
        sem = sem[..., :L]
        nrm = nrm[..., :L]
    return sem, nrm, proto


# --------------------- fused [q | proto | sem | nrm] head -------------------

def _head_kernel(q_ref, proto_ref, sem_ref, nrm_ref,
                 wq_ref, wp_ref, ws_ref, wn_ref, bias_ref, o_ref):
    acc = jnp.dot(q_ref[0], wq_ref[...], preferred_element_type=jnp.float32)
    acc += jnp.dot(sem_ref[0], ws_ref[...], preferred_element_type=jnp.float32)
    acc += jnp.dot(nrm_ref[0], wn_ref[...], preferred_element_type=jnp.float32)
    row = jnp.dot(proto_ref[0], wp_ref[...], preferred_element_type=jnp.float32)
    o_ref[...] = (acc + row + bias_ref[...])[None]


def pallas_head(q_full, proto_cat, sem_feat, nrm_feat, w_head, b_head):
    """Linear head over the concat [q | proto | sem | nrm] WITHOUT materializing
    the concat or the (B, L, nL*C) prototype broadcast in HBM."""
    B, L, CT = q_full.shape
    nL = sem_feat.shape[-1]
    n_out = w_head.shape[1]
    Np = _round_up(n_out, 128)
    nLp = _round_up(nL, 8)
    gen = _tpu_generation()
    tl = min(256 if gen >= 6 else 128, L)

    # weight slices matching the concat order [q | proto | sem | nrm]
    wq = w_head[:CT]
    wp = w_head[CT:2 * CT]
    ws = w_head[2 * CT:2 * CT + nL]
    wn = w_head[2 * CT + nL:2 * CT + 2 * nL]
    pad_n = ((0, 0), (0, Np - n_out))
    wq_p = jnp.pad(wq.astype(jnp.bfloat16), pad_n)
    wp_p = jnp.pad(wp.astype(jnp.bfloat16), pad_n)
    ws_p = jnp.pad(ws.astype(jnp.bfloat16), ((0, nLp - nL), (0, Np - n_out)))
    wn_p = jnp.pad(wn.astype(jnp.bfloat16), ((0, nLp - nL), (0, Np - n_out)))
    bias_p = jnp.pad(b_head.astype(jnp.float32).reshape(1, n_out),
                     ((0, 0), (0, Np - n_out)))
    sem_p = jnp.pad(sem_feat.astype(jnp.bfloat16), ((0, 0), (0, 0), (0, nLp - nL)))
    nrm_p = jnp.pad(nrm_feat.astype(jnp.bfloat16), ((0, 0), (0, 0), (0, nLp - nL)))
    proto_bf = proto_cat.astype(jnp.bfloat16)

    out = pl.pallas_call(
        _head_kernel,
        out_shape=jax.ShapeDtypeStruct((B, L, Np), jnp.float32),
        grid=(B, pl.cdiv(L, tl)),
        in_specs=[pl.BlockSpec((1, tl, CT), lambda b, i: (b, i, 0)),
                  pl.BlockSpec((1, 1, CT), lambda b, i: (b, 0, 0)),
                  pl.BlockSpec((1, tl, nLp), lambda b, i: (b, i, 0)),
                  pl.BlockSpec((1, tl, nLp), lambda b, i: (b, i, 0)),
                  pl.BlockSpec((CT, Np), lambda b, i: (0, 0)),
                  pl.BlockSpec((CT, Np), lambda b, i: (0, 0)),
                  pl.BlockSpec((nLp, Np), lambda b, i: (0, 0)),
                  pl.BlockSpec((nLp, Np), lambda b, i: (0, 0)),
                  pl.BlockSpec((1, Np), lambda b, i: (0, 0))],
        out_specs=pl.BlockSpec((1, tl, Np), lambda b, i: (b, i, 0)),
        compiler_params=pltpu.CompilerParams(
            dimension_semantics=("parallel", "parallel"),
            vmem_limit_bytes=_VMEM_LIMIT),
    )(q_full, proto_bf, sem_p, nrm_p, wq_p, wp_p, ws_p, wn_p, bias_p)
    return out[:, :, :n_out]


# ------------------------------- JAX glue -----------------------------------

def _minmax(x, eps=1e-7):
    lo = jnp.min(x, axis=-1, keepdims=True)
    hi = jnp.max(x, axis=-1, keepdims=True)
    return (x - lo) / (hi - lo + eps)


def patchify(x, p):
    B, C, H, W = x.shape
    h, w = H // p, W // p
    x = x.reshape(B, C, h, p, w, p)
    x = x.transpose(0, 2, 4, 1, 3, 5)                     # B, h, w, C, p, p
    return x.reshape(B, h * w, C * p * p)


def sofs_forward(params, x, s_x, s_y, shot=1, patch=8, n_layers=2, c_feat=128):
    """Eval-mode forward (training=False, meta_cls=False,
    conv_vit_down_sampling=False, shot == 1 branch)."""
    bs_q, _, H, W = x.shape
    assert shot == 1

    # TODO(synk): frozen DINOv2 backbone + forward hooks cannot be reproduced
    # in-script; substituted by a deterministic per-layer patch embedding (one
    # fused Pallas matmul per image batch, bf16 writeback) producing ViT-like tokens.
    def encode(imgs):
        B = imgs.shape[0]
        tok = patchify(imgs, patch)                       # (B, L, Pd) f32
        L = tok.shape[1]
        f = pallas_matmul(tok.reshape(B * L, -1), params['w_embed'],
                          out_dtype=jnp.bfloat16)
        return f.reshape(B, L, n_layers * c_feat)         # fused over layers

    q_full = encode(x)                                    # (B, L, nL*C) bf16
    Bn = bs_q * shot
    s_x_flat = s_x.reshape(Bn, *s_x.shape[2:])
    mask = (s_y.reshape(Bn, 1, H, W) == 1.0).astype(jnp.float32)
    s_full = encode(s_x_flat)                             # (Bn, L, nL*C) bf16

    L = q_full.shape[1]
    h = w = int(math.sqrt(L))

    # F.interpolate(mask, (h, w), bilinear, align_corners=False)
    mask_rs = jax.image.resize(mask, (Bn, 1, h, w), method='bilinear',
                               antialias=False)
    mask_tok = mask_rs.reshape(Bn, L, 1)

    # One fused Pallas pass: Weighted_GAP prototypes + semantic/normal priors
    # for all layers (support block DMA'd once per (layer, batch)).
    sem_raw, nrm_raw, protos = fused_priors(q_full, s_full, mask_tok,
                                            n_layers, c_feat)

    sem_n = _minmax(sem_raw)                              # (nL, B, 1, L)
    # TODO(synk): exact get_normal_similarity helper is outside the provided
    # file; approximated as 1 - prior w.r.t. normal (mask==0) regions.
    nrm_n = 1.0 - _minmax(nrm_raw)
    semantic_similarity = jnp.transpose(sem_n[:, :, 0, :], (1, 0, 2))   # (B,nL,L)
    normal_similarity = jnp.transpose(nrm_n[:, :, 0, :], (1, 0, 2))     # (B,nL,L)
    each_normal_similarity = jnp.max(normal_similarity, axis=1).reshape(
        bs_q, 1, h, w)

    mask_weight = (mask.reshape(bs_q, -1).sum(axis=1) > 0).astype(jnp.float32)

    # TODO(synk): Feature_Recorrect_Module is an external transformer stack not
    # defined in the provided module; substituted with a per-pixel linear head
    # over [query feats | prototypes | priors] whose concat is fused into the
    # head matmul kernel (no (B, L, D) tensor is materialized).
    proto_cat = jnp.transpose(protos[:, :, 0, :], (1, 0, 2)).reshape(
        bs_q, 1, n_layers * c_feat)
    sem_feat = jnp.transpose(semantic_similarity, (0, 2, 1))            # (B,L,nL)
    nrm_feat = jnp.transpose(normal_similarity, (0, 2, 1))
    logits = pallas_head(q_full, proto_cat, sem_feat, nrm_feat,
                         params['w_head'], params['b_head'])            # (B,L,2)
    final_out = logits.reshape(bs_q, h, w, 2).transpose(0, 3, 1, 2)     # (B,2,h,w)

    # eval path: upsample, softmax, blend with normal similarity, 2-ch output
    mask_weight_ = mask_weight[:, None, None]
    normal_out = jax.image.resize(each_normal_similarity, (bs_q, 1, H, W),
                                  method='bilinear', antialias=False)[:, 0]
    final_up = jax.image.resize(final_out, (bs_q, 2, H, W),
                                method='bilinear', antialias=False)
    prob = jax.nn.softmax(final_up, axis=1)[:, 1]
    prob = mask_weight_ * prob + (1.0 - mask_weight_) * normal_out
    return jnp.concatenate([1.0 - prob[:, None], prob[:, None]], axis=1)


# --------------------------------- main --------------------------------------

if __name__ == "__main__":
    key = jax.random.PRNGKey(0)
    kx, ksx, ksy, k1, k2 = jax.random.split(key, 5)

    B, shot, C_in, H, W = 2, 1, 3, 32, 32
    patch = 8                  # -> h = w = 4, L = 16 tokens per image
    C_feat = 128               # per-layer feature dim stand-in (128-multiple,
                               # like the real 768/1024 ViT dims)
    n_layers = 2               # len(prior_layer_pointer)

    x = jax.random.normal(kx, (B, C_in, H, W), jnp.float32)
    s_x = jax.random.normal(ksx, (B, shot, C_in, H, W), jnp.float32)
    s_y = (jax.random.uniform(ksy, (B, shot, 1, H, W)) > 0.5).astype(jnp.float32)

    Pd = C_in * patch * patch
    D = 2 * n_layers * C_feat + 2 * n_layers   # q feats + protos + sem + nrm priors
    params = {
        'w_embed': 0.02 * jax.random.normal(k1, (Pd, n_layers * C_feat),
                                            jnp.float32),
        'w_head': 0.02 * jax.random.normal(k2, (D, 2), jnp.float32),
        'b_head': jnp.zeros((2,), jnp.float32),
    }

    out = sofs_forward(params, x, s_x, s_y, shot=shot, patch=patch,
                       n_layers=n_layers, c_feat=C_feat)
    out = jax.block_until_ready(out)
    assert out.shape == (B, 2, H, W)
    assert bool(jnp.all(jnp.isfinite(out)))
    print("KERNEL_OK")
</pallas_src>

<mosaic_0001>
module attributes {stable_mosaic.version = 11 : i64} {
  func.func @_matmul_bias_kernel(%arg0: i32, %arg1: memref<32x192xbf16, #tpu.memory_space<vmem>>, %arg2: memref<192x256xbf16, #tpu.memory_space<vmem>>, %arg3: memref<1x256xf32, #tpu.memory_space<vmem>>, %arg4: memref<32x256xbf16, #tpu.memory_space<vmem>>) attributes {dimension_semantics = [#tpu.dimension_semantics<parallel>], iteration_bounds = array<i64: 1>, scalar_prefetch = 0 : i64, scratch_operands = 0 : i64, tpu.core_type = #tpu.core_type<tc>, window_params = [{transform_indices = @transform_0, window_bounds = array<i64: 32, 192>}, {pipeline_mode = #tpu.pipeline_mode<synchronous>, transform_indices = @transform_1, window_bounds = array<i64: 192, 256>}, {pipeline_mode = #tpu.pipeline_mode<synchronous>, transform_indices = @transform_2, window_bounds = array<i64: 1, 256>}, {transform_indices = @transform_3, window_bounds = array<i64: 32, 256>}]} {
    %c0 = arith.constant 0 : index
    %c0_0 = arith.constant 0 : index
    %0 = vector.load %arg1[%c0, %c0_0] : memref<32x192xbf16, #tpu.memory_space<vmem>>, vector<32x192xbf16>
    %c0_1 = arith.constant 0 : index
    %c0_2 = arith.constant 0 : index
    %1 = vector.load %arg2[%c0_1, %c0_2] : memref<192x256xbf16, #tpu.memory_space<vmem>>, vector<192x256xbf16>
    %cst = arith.constant dense<0.000000e+00> : vector<32x256xf32>
    %2 = tpu.matmul %0, %1, %cst {dimension_numbers = #tpu.dot_dimension_numbers<[1], [0], [0], [1], [0, 0, 1, 1], [], []>} : vector<32x192xbf16>, vector<192x256xbf16>, vector<32x256xf32> -> vector<32x256xf32>
    %c0_3 = arith.constant 0 : index
    %c0_4 = arith.constant 0 : index
    %3 = vector.load %arg3[%c0_3, %c0_4] : memref<1x256xf32, #tpu.memory_space<vmem>>, vector<1x256xf32>
    %4 = vector.broadcast %3 : vector<1x256xf32> to vector<32x256xf32>
    %5 = arith.addf %2, %4 : vector<32x256xf32>
    %6 = arith.truncf %5 : vector<32x256xf32> to vector<32x256xbf16>
    %c0_5 = arith.constant 0 : index
    %c0_6 = arith.constant 0 : index
    %7 = vector.load %arg4[%c0_5, %c0_6] : memref<32x256xbf16, #tpu.memory_space<vmem>>, vector<32x256xbf16>
    tpu.vector_store %arg4[%c0_5, %c0_6], %6 {strides = array<i32>} : memref<32x256xbf16, #tpu.memory_space<vmem>>, vector<32x256xbf16>,
    return
  }
  func.func @transform_0(%arg0: i32) -> (i32, i32) {
    %c0_i32 = arith.constant 0 : i32
    %c0_i32_0 = arith.constant 0 : i32
    return %arg0, %c0_i32 : i32, i32
  }
  func.func @transform_1(%arg0: i32) -> (i32, i32) {
    %c0_i32 = arith.constant 0 : i32
    %c0_i32_0 = arith.constant 0 : i32
    %c0_i32_1 = arith.constant 0 : i32
    return %c0_i32, %c0_i32_0 : i32, i32
  }
  func.func @transform_2(%arg0: i32) -> (i32, i32) {
    %c0_i32 = arith.constant 0 : i32
    %c0_i32_0 = arith.constant 0 : i32
    %c0_i32_1 = arith.constant 0 : i32
    return %c0_i32, %c0_i32_0 : i32, i32
  }
  func.func @transform_3(%arg0: i32) -> (i32, i32) {
    %c0_i32 = arith.constant 0 : i32
    %c0_i32_0 = arith.constant 0 : i32
    return %arg0, %c0_i32 : i32, i32
  }
}

</mosaic_0001>

<llo_original>
// kernel: tpu_custom_call.1
$region0: #{tpu_custom_call.1}
  #allocation0 [shape = 'u32[]', space=smem, size = 0x4, offset = 0x4, fixed_abs, tag = 'smem constant byte address 0x4 - core index']
  #allocation1 [shape = 'u32[144,128]{1,0:T(1,128)}', space=vmem, size = 0x12000, scoped, tag = 'internal scratch']
  %s0 = inlined_call_operand.hbm [shape: bf16[32,192], index: 0, kind: input, shape index: {}]
  %s1 = inlined_call_operand.hbm [shape: bf16[192,256], index: 1, kind: input, shape index: {}]
  %s2 = inlined_call_operand.vmem [shape: f32[1,256], index: 2, kind: input, shape index: {}]
  %s3 = inlined_call_operand.hbm [shape: bf16[32,256], index: 3, kind: output, shape index: {}]
  %s4 = sld [smem:[#allocation0]]
  $region30: #{tpu_custom_call.1} parent=0
    _
  %s6 = ssub.s32 1, %s4
  %s7 = scalar_select 0, %s6, %s4
  $region1: #{tpu_custom_call.1} parent=0
    #allocation2 [shape = 'u8[16384]{0}', space=vmem, size = 0x4000, scoped, tag = 'input window, operand 0, single buffered']
    #allocation3 [shape = 's32[1]{0}', space=sflag, size = 0x4, scoped, tag = 'scoped memory for tpu_custom_call.1']
    #allocation4 [shape = 's32[1]{0}', space=sflag, size = 0x4, scoped, tag = 'scoped memory for tpu_custom_call.1']
    #allocation5 [shape = 'u8[98304]{0}', space=vmem, size = 0x18000, scoped, tag = 'input window, operand 1, single buffered']
    #allocation6 [shape = 's32[1]{0}', space=sflag, size = 0x4, scoped, tag = 'scoped memory for tpu_custom_call.1']
    #allocation7 [shape = 'u8[16384]{0}', space=vmem, size = 0x4000, scoped, tag = 'output window, operand 0, single buffered']
    %8 = vsyncpa [#allocation3], 0
    %9 = vsyncpa [#allocation6], 0
    %10 = vsyncpa [#allocation4], 0
    // Predicated region
    $region2: #{tpu_custom_call.1} parent=1 // pred_check
      _
    $region3: #{tpu_custom_call.1} parent=1 // pred_check_branch
      %12 = sbr.rel (0) target = $region5
    $region4: #{tpu_custom_call.1} parent=1 // pred_region
      %s14 = ssub.s32 512, 512
      %15 = vsyncadd [#allocation3], %s14
      %s16 = sshll.u32 [#allocation2], 4
      %s17 = int_to_ptr.vmem [resolvable:$true] %s16
      %22 = dma.hbm_to_vmem [thread:$0]  %s0, 512, %s17, [#allocation3], 128, 128, 8
    $region5: #{tpu_custom_call.1} parent=1 // pred_fallthru
      _
    // Predicated region
    $region6: #{tpu_custom_call.1} parent=1 // pred_check
      _
    $region7: #{tpu_custom_call.1} parent=1 // pred_check_branch
      %24 = sbr.rel (0) target = $region9
    $region8: #{tpu_custom_call.1} parent=1 // pred_region
      %s26 = ssub.s32 3072, 3072
      %27 = vsyncadd [#allocation6], %s26
      %s28 = sshll.u32 [#allocation5], 4
      %s29 = int_to_ptr.vmem [resolvable:$true] %s28
      %34 = dma.hbm_to_vmem [thread:$0]  %s1, 3072, %s29, [#allocation6], 128, 128, 8
    $region9: #{tpu_custom_call.1} parent=1 // pred_fallthru
      _
    // Predicated region
    $region10: #{tpu_custom_call.1} parent=1 // pred_check
      _
    $region11: #{tpu_custom_call.1} parent=1 // pred_check_branch
      %36 = sbr.rel (0) target = $region13
    $region12: #{tpu_custom_call.1} parent=1 // pred_region
      _
    $region13: #{tpu_custom_call.1} parent=1 // pred_fallthru
      _
    // Predicated region
    $region14: #{tpu_custom_call.1} parent=1 // pred_check
      _
    $region15: #{tpu_custom_call.1} parent=1 // pred_check_branch
      %38 = sbr.rel (0) target = $region17
    $region16: #{tpu_custom_call.1} parent=1 // pred_region
      %39 = dma.done [#allocation3], 512
    $region17: #{tpu_custom_call.1} parent=1 // pred_fallthru
      _
    // Predicated region
    $region18: #{tpu_custom_call.1} parent=1 // pred_check
      _
    $region19: #{tpu_custom_call.1} parent=1 // pred_check_branch
      %41 = sbr.rel (0) target = $region21
    $region20: #{tpu_custom_call.1} parent=1 // pred_region
      %42 = dma.done [#allocation6], 3072
    $region21: #{tpu_custom_call.1} parent=1 // pred_fallthru
      _
    %v44 = vld [vmem:[#allocation2] sm:$0xff]
    %v45 = vld [vmem:[#allocation2 + $0x8] sm:$0xff]
    %v46 = vld [vmem:[#allocation2 + $0x10] sm:$0xff]
    %v47 = vld [vmem:[#allocation2 + $0x18] sm:$0xff]
    %v48 = vld [vmem:[#allocation5] sm:$0xff]
    %v49 = vld [vmem:[#allocation5 + $0x8] sm:$0xff]
    %v50 = vld [vmem:[#allocation5 + $0x10] sm:$0xff]
    %v51 = vld [vmem:[#allocation5 + $0x18] sm:$0xff]
    %v52 = vld [vmem:[#allocation5 + $0x20] sm:$0xff]
    %v53 = vld [vmem:[#allocation5 + $0x28] sm:$0xff]
    %v54 = vld [vmem:[#allocation5 + $0x30] sm:$0xff]
    %v55 = vld [vmem:[#allocation5 + $0x38] sm:$0xff]
    %v56 = vld [vmem:[#allocation5 + $0x40] sm:$0xff]
    %v57 = vld [vmem:[#allocation5 + $0x48] sm:$0xff]
    %v58 = vld [vmem:[#allocation5 + $0x50] sm:$0xff]
    %v59 = vld [vmem:[#allocation5 + $0x58] sm:$0xff]
    %v60 = vld [vmem:[#allocation5 + $0x60] sm:$0xff]
    %v61 = vld [vmem:[#allocation5 + $0x68] sm:$0xff]
    %v62 = vld [vmem:[#allocation5 + $0x70] sm:$0xff]
    %v63 = vld [vmem:[#allocation5 + $0x78] sm:$0xff]
    %v64 = vld [vmem:[#allocation5 + $0x80] sm:$0xff]
    %v65 = vld [vmem:[#allocation5 + $0x88] sm:$0xff]
    %v66 = vld [vmem:[#allocation5 + $0x90] sm:$0xff]
    %v67 = vld [vmem:[#allocation5 + $0x98] sm:$0xff]
    %v68 = vld [vmem:[#allocation5 + $0xa0] sm:$0xff]
    %v69 = vld [vmem:[#allocation5 + $0xa8] sm:$0xff]
    %v70 = vld [vmem:[#allocation5 + $0xb0] sm:$0xff]
    %v71 = vld [vmem:[#allocation5 + $0xb8] sm:$0xff]
    %v72 = vld [vmem:[%s2] sm:$0x3]
    %v74 = vlaneseq
    %v75 = vshrl.u32 %v74, 7
    %v76 = vsub.s32 0, %v75
    %v77 = vrot.slane %v72, %v76
    %v78 = vlaneseq
    %v79 = vshrl.u32 %v78, 7
    %v80 = vsub.s32 1, %v79
    %v81 = vrot.slane %v72, %v80
    %v88 = vunpack.c.l.b16 %v44
    %v89 = vunpack.c.h.b16 %v44
    %v90 = vunpack.c.l.b16 %v45
    %v91 = vunpack.c.h.b16 %v45
    %v92 = vunpack.c.l.b16 %v46
    %v93 = vunpack.c.h.b16 %v46
    %v94 = vunpack.c.l.b16 %v47
    %v95 = vunpack.c.h.b16 %v47
    %v96 = vpack.c.b16 %v90, %v88
    %v97 = vpack.c.b16 %v91, %v89
    %v98 = vpack.c.b16 %v94, %v92
    %v99 = vpack.c.b16 %v95, %v93
    %v126 = vunpack.c.l.b16 %v48
    %v127 = vunpack.c.h.b16 %v48
    %v128 = vunpack.c.l.b16 %v49
    %v129 = vunpack.c.h.b16 %v49
    %v130 = vunpack.c.l.b16 %v50
    %v131 = vunpack.c.h.b16 %v50
    %v132 = vunpack.c.l.b16 %v51
    %v133 = vunpack.c.h.b16 %v51
    %v134 = vunpack.c.l.b16 %v52
    %v135 = vunpack.c.h.b16 %v52
    %v136 = vunpack.c.l.b16 %v53
    %v137 = vunpack.c.h.b16 %v53
    %v138 = vunpack.c.l.b16 %v54
    %v139 = vunpack.c.h.b16 %v54
    %v140 = vunpack.c.l.b16 %v55
    %v141 = vunpack.c.h.b16 %v55
    %v142 = vunpack.c.l.b16 %v56
    %v143 = vunpack.c.h.b16 %v56
    %v144 = vunpack.c.l.b16 %v57
    %v145 = vunpack.c.h.b16 %v57
    %v146 = vunpack.c.l.b16 %v58
    %v147 = vunpack.c.h.b16 %v58
    %v148 = vunpack.c.l.b16 %v59
    %v149 = vunpack.c.h.b16 %v59
    %v150 = vunpack.c.l.b16 %v60
    %v151 = vunpack.c.h.b16 %v60
    %v152 = vunpack.c.l.b16 %v61
    %v153 = vunpack.c.h.b16 %v61
    %v154 = vunpack.c.l.b16 %v62
    %v155 = vunpack.c.h.b16 %v62
    %v156 = vunpack.c.l.b16 %v63
    %v157 = vunpack.c.h.b16 %v63
    %v158 = vunpack.c.l.b16 %v64
    %v159 = vunpack.c.h.b16 %v64
    %v160 = vunpack.c.l.b16 %v65
    %v161 = vunpack.c.h.b16 %v65
    %v162 = vunpack.c.l.b16 %v66
    %v163 = vunpack.c.h.b16 %v66
    %v164 = vunpack.c.l.b16 %v67
    %v165 = vunpack.c.h.b16 %v67
    %v166 = vunpack.c.l.b16 %v68
    %v167 = vunpack.c.h.b16 %v68
    %v168 = vunpack.c.l.b16 %v69
    %v169 = vunpack.c.h.b16 %v69
    %v170 = vunpack.c.l.b16 %v70
    %v171 = vunpack.c.h.b16 %v70
    %v172 = vunpack.c.l.b16 %v71
    %v173 = vunpack.c.h.b16 %v71
    %v174 = vpack.c.b16 %v128, %v126
    %v175 = vpack.c.b16 %v129, %v127
    %v176 = vpack.c.b16 %v132, %v130
    %v177 = vpack.c.b16 %v133, %v131
    %v178 = vpack.c.b16 %v136, %v134
    %v179 = vpack.c.b16 %v137, %v135
    %v180 = vpack.c.b16 %v140, %v138
    %v181 = vpack.c.b16 %v141, %v139
    %v182 = vpack.c.b16 %v144, %v142
    %v183 = vpack.c.b16 %v145, %v143
    %v184 = vpack.c.b16 %v148, %v146
    %v185 = vpack.c.b16 %v149, %v147
    %v186 = vpack.c.b16 %v152, %v150
    %v187 = vpack.c.b16 %v153, %v151
    %v188 = vpack.c.b16 %v156, %v154
    %v189 = vpack.c.b16 %v157, %v155
    %v190 = vpack.c.b16 %v160, %v158
    %v191 = vpack.c.b16 %v161, %v159
    %v192 = vpack.c.b16 %v164, %v162
    %v193 = vpack.c.b16 %v165, %v163
    %v194 = vpack.c.b16 %v168, %v166
    %v195 = vpack.c.b16 %v169, %v167
    %v196 = vpack.c.b16 %v172, %v170
    %v197 = vpack.c.b16 %v173, %v171
    %vm222 = vcmask 523264
    %v224 = vsel %vm222, %v97, 0
    %v227 = vsel %vm222, %v99, 0
    %229 = vmatprep.subr.bf16.mxu0 %v175
    %230 = vmatpush1.bf16.msra.mxu0 %v174
    %231 = vmatprep.subr.bf16.mxu0 %v177
    %232 = vmatpush1.bf16.msra.mxu0 %v176
    %233 = vmatprep.subr.bf16.mxu0 %v179
    %234 = vmatpush1.bf16.msra.mxu0 %v178
    %235 = vmatprep.subr.bf16.mxu0 %v181
    %236 = vmatpush1.bf16.msra.mxu0 %v180
    %237 = vmatprep.subr.bf16.mxu0 %v183
    %238 = vmatpush1.bf16.msra.mxu0 %v182
    %239 = vmatprep.subr.bf16.mxu0 %v185
    %240 = vmatpush1.bf16.msra.mxu0 %v184
    %241 = vmatprep.subr.bf16.mxu0 %v187
    %242 = vmatpush1.bf16.msra.mxu0 %v186
    %243 = vmatprep.subr.bf16.mxu0 %v189
    %244 = vmatpush1.bf16.msra.mxu0 %v188
    %245 = vmatprep.subr.bf16.mxu0 %v191
    %246 = vmatpush1.bf16.msra.mxu0 %v190
    %247 = vmatprep.subr.bf16.mxu0 %v193
    %248 = vmatpush1.bf16.msra.mxu0 %v192
    %249 = vmatprep.subr.bf16.mxu0 %v195
    %250 = vmatpush1.bf16.msra.mxu0 %v194
    %251 = vmatprep.subr.bf16.mxu0 %v197
    %252 = vmatpush1.bf16.msra.mxu0 %v196
    %253 = vmatprep.subr.bf16.mxu0 0
    %254 = vmatpush1.bf16.msra.mxu0 0
    %255 = vmatprep.subr.bf16.mxu0 0
    %256 = vmatpush1.bf16.msra.mxu0 0
    %257 = vmatprep.subr.bf16.mxu0 0
    %258 = vmatpush1.bf16.msra.mxu0 0
    %259 = vmatprep.subr.bf16.mxu0 0
    %260 = vmatpush1.bf16.msra.mxu0 0
    %261 = vmatprep.mubr.bf16.mxu0 %v224
    %262 = vmatmul.mubr.bf16.gmra.mrb[0].mxu0 %v96
    %v263 = vpop.f32.mrb[0].mxu0
    %v264 = vadd.f32 %v77, %v263
    %v265 = vpop.f32.mrb[0].mxu0
    %v266 = vadd.f32 %v81, %v265
    %v267 = vpop.f32.mrb[0].mxu0
    %v268 = vadd.f32 %v77, %v267
    %v269 = vpop.f32.mrb[0].mxu0
    %v270 = vadd.f32 %v81, %v269
    %271 = vmatprep.mubr.bf16.mxu0 %v227
    %272 = vmatmul.mubr.bf16.gmra.mrb[0].mxu0 %v98
    %v273 = vpop.f32.mrb[0].mxu0
    %v274 = vadd.f32 %v77, %v273
    %v275 = vpop.f32.mrb[0].mxu0
    %v276 = vadd.f32 %v81, %v275
    %v277 = vpop.f32.mrb[0].mxu0
    %v278 = vadd.f32 %v77, %v277
    %v279 = vpop.f32.mrb[0].mxu0
    %v280 = vadd.f32 %v81, %v279
    %281 = vdwg.mxu0
    %v282 = vpack.c.bf16 %v268, %v264
    %v283 = vpack.c.bf16 %v270, %v266
    %v284 = vpack.c.bf16 %v278, %v274
    %v285 = vpack.c.bf16 %v280, %v276
    %v290 = vunpack.c.l.b16 %v282
    %v291 = vunpack.c.l.b16 %v283
    %v292 = vunpack.c.h.b16 %v282
    %v293 = vunpack.c.h.b16 %v283
    %v294 = vunpack.c.l.b16 %v284
    %v295 = vunpack.c.l.b16 %v285
    %v296 = vunpack.c.h.b16 %v284
    %v297 = vunpack.c.h.b16 %v285
    %v298 = vpack.c.b16 %v291, %v290
    %v299 = vpack.c.b16 %v293, %v292
    %v300 = vpack.c.b16 %v295, %v294
    %v301 = vpack.c.b16 %v297, %v296
    %306 = vst [vmem:[#allocation7] sm:$0xff] %v298
    %307 = vst [vmem:[#allocation7 + $0x8] sm:$0xff] %v299
    %308 = vst [vmem:[#allocation7 + $0x10] sm:$0xff] %v300
    %309 = vst [vmem:[#allocation7 + $0x18] sm:$0xff] %v301
    // Predicated region
    $region22: #{tpu_custom_call.1} parent=1 // pred_check
      _
    $region23: #{tpu_custom_call.1} parent=1 // pred_check_branch
      %311 = sbr.rel (0) target = $region25
    $region24: #{tpu_custom_call.1} parent=1 // pred_region
      %s313 = ssub.s32 512, 512
      %314 = vsyncadd [#allocation4], %s313
      %s315 = sshll.u32 [#allocation7], 4
      %s316 = int_to_ptr.vmem [resolvable:$true] %s315
      %321 = dma.vmem_to_hbm [thread:$0]  %s316, 512, %s3, [#allocation4], 128, 128, 8
    $region25: #{tpu_custom_call.1} parent=1 // pred_fallthru
      _
    // Predicated region
    $region26: #{tpu_custom_call.1} parent=1 // pred_check
      _
    $region27: #{tpu_custom_call.1} parent=1 // pred_check_branch
      %323 = sbr.rel (0) target = $region29
    $region28: #{tpu_custom_call.1} parent=1 // pred_region
      %324 = dma.done [#allocation4], 512
    $region29: #{tpu_custom_call.1} parent=1 // pred_fallthru
      _
    %325 = vsyncpa [#allocation3], 1
    %326 = vsyncpa [#allocation6], 1
    %327 = vsyncpa [#allocation4], 1

</llo_original>
